<compile_context>
chip_gen: v5e
topology: v5e:2x2
jax: 0.10.0
libtpu: 0.0.40
codegen_flags: <defaults>
</compile_context>

<pallas_src>
import numpy as np
import jax
import jax.numpy as jnp
from jax.experimental import pallas as pl
from jax.experimental.pallas import tpu as pltpu


def _round_up(x, m):
    return ((x + m - 1) // m) * m


def _vmem_capacity_bytes():
    try:
        return int(pltpu.get_tpu_info().vmem_capacity_bytes)
    except Exception:
        return 64 * 1024 * 1024     # safe lower bound (v7x per-core VMEM)


def _choose_tile(lr, halo_pad, two_cin, two_cout, ck2, bpe, batch):
    """Spatial tile width (lanes): multiple of halo_pad (itself a multiple of
    128), budgeted against real VMEM capacity, >=2 grid steps when possible."""
    cap = _vmem_capacity_bytes()
    budget = int(cap * 0.35)
    # thw-independent footprint: weight block (double-buffered) + bias.
    fixed = 2 * two_cout * ck2 * bpe + 2 * two_cout * 4
    avail = max(budget - fixed, 1 << 20)
    # per-lane-column bytes: main+halo slabs (2 bufs each, halo counted
    # conservatively at full width) + output (2 bufs) + patch scratch + f32 acc.
    per_col = bpe * (4 * two_cin + 2 * two_cout + ck2) + 4 * two_cout
    max_cols = max(avail // per_col, halo_pad)
    thw = min(_round_up(lr, halo_pad), (max_cols // halo_pad) * halo_pad)
    thw = max(thw, halo_pad)
    # Keep at least two total grid steps (v7x megacore) when the problem allows.
    if batch * pl.cdiv(lr, thw) < 2:
        thw = max(_round_up(pl.cdiv(lr, 2), halo_pad), halo_pad)
    return thw


def _make_kernel(K, Wp, two_cin, thw, precision):
    kk_offsets = [ky * Wp + kx for ky in range(K) for kx in range(K)]

    def kernel(w_ref, b_ref, x_ref, xh_ref, out_ref, patch_ref):
        # w_ref   : (2*Cout, 2*Cin*K*K)  stacked complex weight (native dtype)
        # b_ref   : (2*Cout, 1)          fused complex bias (f32)
        # x_ref   : (1, 2*Cin, thw)      flat activation slab for this tile
        # xh_ref  : (1, 2*Cin, halo_pad) halo slab (columns just after the tile)
        # out_ref : (1, 2*Cout, thw)     rows [:Cout] = out_r, rows [Cout:] = out_i
        # patch_ref: VMEM (2*Cin*K*K, thw) in-VMEM im2col scratch
        for kk, off in enumerate(kk_offsets):       # static K*K unroll
            r0 = kk * two_cin
            if off == 0:
                patch_ref[r0:r0 + two_cin, :] = x_ref[0]
            elif off >= thw:                         # degenerate tiny-tile case
                patch_ref[r0:r0 + two_cin, :] = xh_ref[0, :, :thw]
            else:
                patch_ref[r0:r0 + two_cin, :thw - off] = x_ref[0, :, off:]
                patch_ref[r0:r0 + two_cin, thw - off:] = xh_ref[0, :, :off]
        acc = jnp.dot(w_ref[...], patch_ref[...],
                      preferred_element_type=jnp.float32, precision=precision)
        out_ref[0] = (acc + b_ref[...]).astype(out_ref.dtype)

    return kernel


def complex_conv2d(input_r, input_i, weight_r, weight_i, bias_r, bias_i,
                   stride=1, padding=0, precision=jax.lax.Precision.HIGHEST):
    """Equivalent of ComplexConv2d.forward (NCHW inputs, OIHW weights)."""
    if stride != 1:
        raise NotImplementedError("stride != 1")   # TODO(synk): strided conv
    assert input_r.shape == input_i.shape
    N, Cin, H, W = input_r.shape
    Cout, Cin_w, K, K2 = weight_r.shape
    assert Cin_w == Cin and K2 == K and weight_i.shape == weight_r.shape
    dtype = input_r.dtype
    bpe = jnp.dtype(dtype).itemsize
    if dtype != jnp.float32:
        precision = None            # HIGHEST only meaningful for f32 MXU passes
    if bias_r is None:
        bias_r = jnp.zeros((Cout,), jnp.float32)
        bias_i = jnp.zeros((Cout,), jnp.float32)

    Hp, Wp = H + 2 * padding, W + 2 * padding
    Ho, Wo = Hp - K + 1, Wp - K + 1
    assert Ho > 0 and Wo > 0

    two_cin, two_cout = 2 * Cin, 2 * Cout
    CK2 = K * K * two_cin                # stacked contraction length
    Lr = Ho * Wp                         # padded-width output raster length
    halo = (K - 1) * Wp + (K - 1)        # largest flat shift of any conv tap
    halo_pad = _round_up(max(halo, 1), 128)

    thw = _choose_tile(Lr, halo_pad, two_cin, two_cout, CK2, bpe, N)
    n_t = pl.cdiv(Lr, thw)
    Lr_pad = n_t * thw
    Li = Lr_pad + halo_pad
    ratio = thw // halo_pad              # halo-block index stride (exact)

    # Only wrapper-side data movement: channel-stack, pad, flatten (no im2col).
    x = jnp.concatenate([input_r, input_i], axis=1)
    if padding:
        x = jnp.pad(x, ((0, 0), (0, 0), (padding, padding), (padding, padding)))
    x = x.reshape(N, two_cin, Hp * Wp)
    x = jnp.pad(x, ((0, 0), (0, 0), (0, Li - Hp * Wp)))

    # Fused complex weight, contraction column order (ky, kx, part, ci) matching
    # the in-kernel patch layout:  [out_r; out_i] = [[Vr,-Vi],[Vi,Vr]] @ [P_r; P_i]
    def _stack(w_for_real, w_for_imag):
        w = jnp.stack([w_for_real, w_for_imag], axis=-1)      # (Cout,Cin,K,K,2)
        return w.transpose(0, 2, 3, 4, 1).reshape(Cout, CK2)  # (Cout, K*K*2*Cin)

    wr = weight_r.astype(dtype)
    wi = weight_i.astype(dtype)
    w_big = jnp.concatenate([_stack(wr, -wi), _stack(wi, wr)], axis=0)
    b_cat = jnp.concatenate([bias_r - bias_i, bias_r + bias_i]
                            ).astype(jnp.float32)[:, None]    # (2*Cout, 1)

    kernel = _make_kernel(K, Wp, two_cin, thw, precision)

    cost = pl.CostEstimate(
        flops=2 * N * Lr_pad * two_cout * CK2,
        transcendentals=0,
        bytes_accessed=(N * two_cin * (Li + n_t * halo_pad)
                        + N * two_cout * Lr_pad + two_cout * CK2) * bpe,
    )
    vmem_limit = min(int(_vmem_capacity_bytes() * 0.75), 112 * 1024 * 1024)

    out = pl.pallas_call(
        kernel,
        out_shape=jax.ShapeDtypeStruct((N, two_cout, Lr_pad), dtype),
        grid=(N, n_t),
        in_specs=[
            pl.BlockSpec((two_cout, CK2), lambda n, t: (0, 0)),        # weights (grid-invariant)
            pl.BlockSpec((two_cout, 1), lambda n, t: (0, 0)),          # fused bias (grid-invariant)
            pl.BlockSpec((1, two_cin, thw), lambda n, t: (n, 0, t)),   # main activation slab
            pl.BlockSpec((1, two_cin, halo_pad),
                         lambda n, t: (n, 0, (t + 1) * ratio)),        # halo slab
        ],
        out_specs=pl.BlockSpec((1, two_cout, thw), lambda n, t: (n, 0, t)),
        scratch_shapes=[pltpu.VMEM((CK2, thw), dtype)],                # in-VMEM im2col
        compiler_params=pltpu.CompilerParams(
            dimension_semantics=("parallel", "parallel"),
            vmem_limit_bytes=vmem_limit),
        cost_estimate=cost,
    )(w_big, b_cat, x, x)

    out = out[:, :, :Lr].reshape(N, two_cout, Ho, Wp)[:, :, :, :Wo]
    return out[:, :Cout], out[:, Cout:]


if __name__ == "__main__":
    key = jax.random.PRNGKey(0)
    k1, k2, k3, k4, k5, k6 = jax.random.split(key, 6)

    # Module defaults: kernel_size=3, stride=1, padding=0, bias=True.
    N, Cin, Cout, H, W, K = 2, 4, 4, 16, 16, 3
    input_r = jax.random.normal(k1, (N, Cin, H, W), dtype=jnp.float32)
    input_i = jax.random.normal(k2, (N, Cin, H, W), dtype=jnp.float32)
    fan_in = Cin * K * K
    bound = 1.0 / np.sqrt(fan_in)
    weight_r = jax.random.uniform(k3, (Cout, Cin, K, K), jnp.float32, -bound, bound)
    weight_i = jax.random.uniform(k4, (Cout, Cin, K, K), jnp.float32, -bound, bound)
    bias_r = jax.random.uniform(k5, (Cout,), jnp.float32, -bound, bound)
    bias_i = jax.random.uniform(k6, (Cout,), jnp.float32, -bound, bound)

    out_r, out_i = complex_conv2d(input_r, input_i, weight_r, weight_i,
                                  bias_r, bias_i, stride=1, padding=0)
    out_r, out_i = jax.block_until_ready((out_r, out_i))

    # Reference: plain XLA convolutions with the exact module semantics.
    def conv2d(x, w, b):
        y = jax.lax.conv_general_dilated(
            x, w, window_strides=(1, 1), padding=((0, 0), (0, 0)),
            dimension_numbers=("NCHW", "OIHW", "NCHW"),
            precision=jax.lax.Precision.HIGHEST)
        return y + b[None, :, None, None]

    ref_r = conv2d(input_r, weight_r, bias_r) - conv2d(input_i, weight_i, bias_i)
    ref_i = conv2d(input_i, weight_r, bias_r) + conv2d(input_r, weight_i, bias_i)

    Ho, Wo = H - K + 1, W - K + 1
    assert out_r.shape == (N, Cout, Ho, Wo) and out_i.shape == (N, Cout, Ho, Wo)
    np.testing.assert_allclose(np.asarray(out_r), np.asarray(ref_r), rtol=1e-4, atol=1e-4)
    np.testing.assert_allclose(np.asarray(out_i), np.asarray(ref_i), rtol=1e-4, atol=1e-4)

    print("KERNEL_OK")
</pallas_src>

<mosaic_0001>
module attributes {stable_mosaic.version = 11 : i64} {
  func.func @kernel(%arg0: i32, %arg1: i32, %arg2: memref<8x72xf32, #tpu.memory_space<vmem>>, %arg3: memref<8x1xf32, #tpu.memory_space<vmem>>, %arg4: memref<1x8x256xf32, #tpu.memory_space<vmem>>, %arg5: memref<1x8x128xf32, #tpu.memory_space<vmem>>, %arg6: memref<1x8x256xf32, #tpu.memory_space<vmem>>, %arg7: memref<72x256xf32, #tpu.memory_space<vmem>>) attributes {dimension_semantics = [#tpu.dimension_semantics<parallel>, #tpu.dimension_semantics<parallel>], iteration_bounds = array<i64: 2, 1>, scalar_prefetch = 0 : i64, scratch_operands = 1 : i64, tpu.core_type = #tpu.core_type<tc>, window_params = [{pipeline_mode = #tpu.pipeline_mode<synchronous>, transform_indices = @transform_0, window_bounds = array<i64: 8, 72>}, {pipeline_mode = #tpu.pipeline_mode<synchronous>, transform_indices = @transform_1, window_bounds = array<i64: 8, 1>}, {transform_indices = @transform_2, window_bounds = array<i64: 1, 8, 256>}, {transform_indices = @transform_3, window_bounds = array<i64: 1, 8, 128>}, {transform_indices = @transform_4, window_bounds = array<i64: 1, 8, 256>}]} {
    %c0 = arith.constant 0 : index
    %c0_0 = arith.constant 0 : index
    %c0_1 = arith.constant 0 : index
    %0 = vector.load %arg4[%c0, %c0_0, %c0_1] : memref<1x8x256xf32, #tpu.memory_space<vmem>>, vector<1x8x256xf32>
    %1 = vector.shape_cast %0 : vector<1x8x256xf32> to vector<8x256xf32>
    %c0_2 = arith.constant 0 : index
    %c0_3 = arith.constant 0 : index
    %2 = vector.load %arg7[%c0_2, %c0_3] : memref<72x256xf32, #tpu.memory_space<vmem>>, vector<8x256xf32>
    tpu.vector_store %arg7[%c0_2, %c0_3], %1 {strides = array<i32>} : memref<72x256xf32, #tpu.memory_space<vmem>>, vector<8x256xf32>,
    %c0_4 = arith.constant 0 : index
    %c0_5 = arith.constant 0 : index
    %c1 = arith.constant 1 : index
    %3 = vector.load %arg4[%c0_4, %c0_5, %c1] : memref<1x8x256xf32, #tpu.memory_space<vmem>>, vector<1x8x255xf32>
    %4 = vector.shape_cast %3 : vector<1x8x255xf32> to vector<8x255xf32>
    %c8 = arith.constant 8 : index
    %c0_6 = arith.constant 0 : index
    %5 = vector.load %arg7[%c8, %c0_6] : memref<72x256xf32, #tpu.memory_space<vmem>>, vector<8x255xf32>
    tpu.vector_store %arg7[%c8, %c0_6], %4 {strides = array<i32>} : memref<72x256xf32, #tpu.memory_space<vmem>>, vector<8x255xf32>,
    %c0_7 = arith.constant 0 : index
    %c0_8 = arith.constant 0 : index
    %c0_9 = arith.constant 0 : index
    %6 = vector.load %arg5[%c0_7, %c0_8, %c0_9] : memref<1x8x128xf32, #tpu.memory_space<vmem>>, vector<1x8x1xf32>
    %7 = vector.shape_cast %6 : vector<1x8x1xf32> to vector<8x1xf32>
    %c8_10 = arith.constant 8 : index
    %c255 = arith.constant 255 : index
    %8 = vector.load %arg7[%c8_10, %c255] : memref<72x256xf32, #tpu.memory_space<vmem>>, vector<8x1xf32>
    tpu.vector_store %arg7[%c8_10, %c255], %7 {strides = array<i32>} : memref<72x256xf32, #tpu.memory_space<vmem>>, vector<8x1xf32>,
    %c0_11 = arith.constant 0 : index
    %c0_12 = arith.constant 0 : index
    %c2 = arith.constant 2 : index
    %9 = vector.load %arg4[%c0_11, %c0_12, %c2] : memref<1x8x256xf32, #tpu.memory_space<vmem>>, vector<1x8x254xf32>
    %10 = vector.shape_cast %9 : vector<1x8x254xf32> to vector<8x254xf32>
    %c16 = arith.constant 16 : index
    %c0_13 = arith.constant 0 : index
    %11 = vector.load %arg7[%c16, %c0_13] : memref<72x256xf32, #tpu.memory_space<vmem>>, vector<8x254xf32>
    tpu.vector_store %arg7[%c16, %c0_13], %10 {strides = array<i32>} : memref<72x256xf32, #tpu.memory_space<vmem>>, vector<8x254xf32>,
    %c0_14 = arith.constant 0 : index
    %c0_15 = arith.constant 0 : index
    %c0_16 = arith.constant 0 : index
    %12 = vector.load %arg5[%c0_14, %c0_15, %c0_16] : memref<1x8x128xf32, #tpu.memory_space<vmem>>, vector<1x8x2xf32>
    %13 = vector.shape_cast %12 : vector<1x8x2xf32> to vector<8x2xf32>
    %c16_17 = arith.constant 16 : index
    %c254 = arith.constant 254 : index
    %14 = vector.load %arg7[%c16_17, %c254] : memref<72x256xf32, #tpu.memory_space<vmem>>, vector<8x2xf32>
    tpu.vector_store %arg7[%c16_17, %c254], %13 {strides = array<i32>} : memref<72x256xf32, #tpu.memory_space<vmem>>, vector<8x2xf32>,
    %c0_18 = arith.constant 0 : index
    %c0_19 = arith.constant 0 : index
    %c16_20 = arith.constant 16 : index
    %15 = vector.load %arg4[%c0_18, %c0_19, %c16_20] : memref<1x8x256xf32, #tpu.memory_space<vmem>>, vector<1x8x240xf32>
    %16 = vector.shape_cast %15 : vector<1x8x240xf32> to vector<8x240xf32>
    %c24 = arith.constant 24 : index
    %c0_21 = arith.constant 0 : index
    %17 = vector.load %arg7[%c24, %c0_21] : memref<72x256xf32, #tpu.memory_space<vmem>>, vector<8x240xf32>
    tpu.vector_store %arg7[%c24, %c0_21], %16 {strides = array<i32>} : memref<72x256xf32, #tpu.memory_space<vmem>>, vector<8x240xf32>,
    %c0_22 = arith.constant 0 : index
    %c0_23 = arith.constant 0 : index
    %c0_24 = arith.constant 0 : index
    %18 = vector.load %arg5[%c0_22, %c0_23, %c0_24] : memref<1x8x128xf32, #tpu.memory_space<vmem>>, vector<1x8x16xf32>
    %19 = vector.shape_cast %18 : vector<1x8x16xf32> to vector<8x16xf32>
    %c24_25 = arith.constant 24 : index
    %c240 = arith.constant 240 : index
    %20 = vector.load %arg7[%c24_25, %c240] : memref<72x256xf32, #tpu.memory_space<vmem>>, vector<8x16xf32>
    tpu.vector_store %arg7[%c24_25, %c240], %19 {strides = array<i32>} : memref<72x256xf32, #tpu.memory_space<vmem>>, vector<8x16xf32>,
    %c0_26 = arith.constant 0 : index
    %c0_27 = arith.constant 0 : index
    %c17 = arith.constant 17 : index
    %21 = vector.load %arg4[%c0_26, %c0_27, %c17] : memref<1x8x256xf32, #tpu.memory_space<vmem>>, vector<1x8x239xf32>
    %22 = vector.shape_cast %21 : vector<1x8x239xf32> to vector<8x239xf32>
    %c32 = arith.constant 32 : index
    %c0_28 = arith.constant 0 : index
    %23 = vector.load %arg7[%c32, %c0_28] : memref<72x256xf32, #tpu.memory_space<vmem>>, vector<8x239xf32>
    tpu.vector_store %arg7[%c32, %c0_28], %22 {strides = array<i32>} : memref<72x256xf32, #tpu.memory_space<vmem>>, vector<8x239xf32>,
    %c0_29 = arith.constant 0 : index
    %c0_30 = arith.constant 0 : index
    %c0_31 = arith.constant 0 : index
    %24 = vector.load %arg5[%c0_29, %c0_30, %c0_31] : memref<1x8x128xf32, #tpu.memory_space<vmem>>, vector<1x8x17xf32>
    %25 = vector.shape_cast %24 : vector<1x8x17xf32> to vector<8x17xf32>
    %c32_32 = arith.constant 32 : index
    %c239 = arith.constant 239 : index
    %26 = vector.load %arg7[%c32_32, %c239] : memref<72x256xf32, #tpu.memory_space<vmem>>, vector<8x17xf32>
    tpu.vector_store %arg7[%c32_32, %c239], %25 {strides = array<i32>} : memref<72x256xf32, #tpu.memory_space<vmem>>, vector<8x17xf32>,
    %c0_33 = arith.constant 0 : index
    %c0_34 = arith.constant 0 : index
    %c18 = arith.constant 18 : index
    %27 = vector.load %arg4[%c0_33, %c0_34, %c18] : memref<1x8x256xf32, #tpu.memory_space<vmem>>, vector<1x8x238xf32>
    %28 = vector.shape_cast %27 : vector<1x8x238xf32> to vector<8x238xf32>
    %c40 = arith.constant 40 : index
    %c0_35 = arith.constant 0 : index
    %29 = vector.load %arg7[%c40, %c0_35] : memref<72x256xf32, #tpu.memory_space<vmem>>, vector<8x238xf32>
    tpu.vector_store %arg7[%c40, %c0_35], %28 {strides = array<i32>} : memref<72x256xf32, #tpu.memory_space<vmem>>, vector<8x238xf32>,
    %c0_36 = arith.constant 0 : index
    %c0_37 = arith.constant 0 : index
    %c0_38 = arith.constant 0 : index
    %30 = vector.load %arg5[%c0_36, %c0_37, %c0_38] : memref<1x8x128xf32, #tpu.memory_space<vmem>>, vector<1x8x18xf32>
    %31 = vector.shape_cast %30 : vector<1x8x18xf32> to vector<8x18xf32>
    %c40_39 = arith.constant 40 : index
    %c238 = arith.constant 238 : index
    %32 = vector.load %arg7[%c40_39, %c238] : memref<72x256xf32, #tpu.memory_space<vmem>>, vector<8x18xf32>
    tpu.vector_store %arg7[%c40_39, %c238], %31 {strides = array<i32>} : memref<72x256xf32, #tpu.memory_space<vmem>>, vector<8x18xf32>,
    %c0_40 = arith.constant 0 : index
    %c0_41 = arith.constant 0 : index
    %c32_42 = arith.constant 32 : index
    %33 = vector.load %arg4[%c0_40, %c0_41, %c32_42] : memref<1x8x256xf32, #tpu.memory_space<vmem>>, vector<1x8x224xf32>
    %34 = vector.shape_cast %33 : vector<1x8x224xf32> to vector<8x224xf32>
    %c48 = arith.constant 48 : index
    %c0_43 = arith.constant 0 : index
    %35 = vector.load %arg7[%c48, %c0_43] : memref<72x256xf32, #tpu.memory_space<vmem>>, vector<8x224xf32>
    tpu.vector_store %arg7[%c48, %c0_43], %34 {strides = array<i32>} : memref<72x256xf32, #tpu.memory_space<vmem>>, vector<8x224xf32>,
    %c0_44 = arith.constant 0 : index
    %c0_45 = arith.constant 0 : index
    %c0_46 = arith.constant 0 : index
    %36 = vector.load %arg5[%c0_44, %c0_45, %c0_46] : memref<1x8x128xf32, #tpu.memory_space<vmem>>, vector<1x8x32xf32>
    %37 = vector.shape_cast %36 : vector<1x8x32xf32> to vector<8x32xf32>
    %c48_47 = arith.constant 48 : index
    %c224 = arith.constant 224 : index
    %38 = vector.load %arg7[%c48_47, %c224] : memref<72x256xf32, #tpu.memory_space<vmem>>, vector<8x32xf32>
    tpu.vector_store %arg7[%c48_47, %c224], %37 {strides = array<i32>} : memref<72x256xf32, #tpu.memory_space<vmem>>, vector<8x32xf32>,
    %c0_48 = arith.constant 0 : index
    %c0_49 = arith.constant 0 : index
    %c33 = arith.constant 33 : index
    %39 = vector.load %arg4[%c0_48, %c0_49, %c33] : memref<1x8x256xf32, #tpu.memory_space<vmem>>, vector<1x8x223xf32>
    %40 = vector.shape_cast %39 : vector<1x8x223xf32> to vector<8x223xf32>
    %c56 = arith.constant 56 : index
    %c0_50 = arith.constant 0 : index
    %41 = vector.load %arg7[%c56, %c0_50] : memref<72x256xf32, #tpu.memory_space<vmem>>, vector<8x223xf32>
    tpu.vector_store %arg7[%c56, %c0_50], %40 {strides = array<i32>} : memref<72x256xf32, #tpu.memory_space<vmem>>, vector<8x223xf32>,
    %c0_51 = arith.constant 0 : index
    %c0_52 = arith.constant 0 : index
    %c0_53 = arith.constant 0 : index
    %42 = vector.load %arg5[%c0_51, %c0_52, %c0_53] : memref<1x8x128xf32, #tpu.memory_space<vmem>>, vector<1x8x33xf32>
    %43 = vector.shape_cast %42 : vector<1x8x33xf32> to vector<8x33xf32>
    %c56_54 = arith.constant 56 : index
    %c223 = arith.constant 223 : index
    %44 = vector.load %arg7[%c56_54, %c223] : memref<72x256xf32, #tpu.memory_space<vmem>>, vector<8x33xf32>
    tpu.vector_store %arg7[%c56_54, %c223], %43 {strides = array<i32>} : memref<72x256xf32, #tpu.memory_space<vmem>>, vector<8x33xf32>,
    %c0_55 = arith.constant 0 : index
    %c0_56 = arith.constant 0 : index
    %c34 = arith.constant 34 : index
    %45 = vector.load %arg4[%c0_55, %c0_56, %c34] : memref<1x8x256xf32, #tpu.memory_space<vmem>>, vector<1x8x222xf32>
    %46 = vector.shape_cast %45 : vector<1x8x222xf32> to vector<8x222xf32>
    %c64 = arith.constant 64 : index
    %c0_57 = arith.constant 0 : index
    %47 = vector.load %arg7[%c64, %c0_57] : memref<72x256xf32, #tpu.memory_space<vmem>>, vector<8x222xf32>
    tpu.vector_store %arg7[%c64, %c0_57], %46 {strides = array<i32>} : memref<72x256xf32, #tpu.memory_space<vmem>>, vector<8x222xf32>,
    %c0_58 = arith.constant 0 : index
    %c0_59 = arith.constant 0 : index
    %c0_60 = arith.constant 0 : index
    %48 = vector.load %arg5[%c0_58, %c0_59, %c0_60] : memref<1x8x128xf32, #tpu.memory_space<vmem>>, vector<1x8x34xf32>
    %49 = vector.shape_cast %48 : vector<1x8x34xf32> to vector<8x34xf32>
    %c64_61 = arith.constant 64 : index
    %c222 = arith.constant 222 : index
    %50 = vector.load %arg7[%c64_61, %c222] : memref<72x256xf32, #tpu.memory_space<vmem>>, vector<8x34xf32>
    tpu.vector_store %arg7[%c64_61, %c222], %49 {strides = array<i32>} : memref<72x256xf32, #tpu.memory_space<vmem>>, vector<8x34xf32>,
    %c0_62 = arith.constant 0 : index
    %c0_63 = arith.constant 0 : index
    %51 = vector.load %arg2[%c0_62, %c0_63] : memref<8x72xf32, #tpu.memory_space<vmem>>, vector<8x72xf32>
    %c0_64 = arith.constant 0 : index
    %c0_65 = arith.constant 0 : index
    %52 = vector.load %arg7[%c0_64, %c0_65] : memref<72x256xf32, #tpu.memory_space<vmem>>, vector<72x256xf32>
    %cst = arith.constant dense<0.000000e+00> : vector<8x256xf32>
    %53 = tpu.matmul %51, %52, %cst {dimension_numbers = #tpu.dot_dimension_numbers<[1], [0], [0], [1], [0, 0, 1, 1], [], []>, precision = #tpu.contract_precision<fp32>} : vector<8x72xf32>, vector<72x256xf32>, vector<8x256xf32> -> vector<8x256xf32>
    %c0_66 = arith.constant 0 : index
    %c0_67 = arith.constant 0 : index
    %54 = vector.load %arg3[%c0_66, %c0_67] : memref<8x1xf32, #tpu.memory_space<vmem>>, vector<8x1xf32>
    %55 = vector.broadcast %54 : vector<8x1xf32> to vector<8x256xf32>
    %56 = arith.addf %53, %55 : vector<8x256xf32>
    %c0_68 = arith.constant 0 : index
    %c0_69 = arith.constant 0 : index
    %c0_70 = arith.constant 0 : index
    %57 = vector.load %arg6[%c0_68, %c0_69, %c0_70] : memref<1x8x256xf32, #tpu.memory_space<vmem>>, vector<1x8x256xf32>
    %58 = vector.shape_cast %57 : vector<1x8x256xf32> to vector<8x256xf32>
    %59 = vector.shape_cast %56 : vector<8x256xf32> to vector<1x8x256xf32>
    tpu.vector_store %arg6[%c0_68, %c0_69, %c0_70], %59 {strides = array<i32>} : memref<1x8x256xf32, #tpu.memory_space<vmem>>, vector<1x8x256xf32>,
    return
  }
  func.func @transform_0(%arg0: i32, %arg1: i32) -> (i32, i32) {
    %c0_i32 = arith.constant 0 : i32
    %c0_i32_0 = arith.constant 0 : i32
    %c0_i32_1 = arith.constant 0 : i32
    return %c0_i32, %c0_i32_0 : i32, i32
  }
  func.func @transform_1(%arg0: i32, %arg1: i32) -> (i32, i32) {
    %c0_i32 = arith.constant 0 : i32
    %c0_i32_0 = arith.constant 0 : i32
    %c0_i32_1 = arith.constant 0 : i32
    return %c0_i32, %c0_i32_0 : i32, i32
  }
  func.func @transform_2(%arg0: i32, %arg1: i32) -> (i32, i32, i32) {
    %c0_i32 = arith.constant 0 : i32
    %c0_i32_0 = arith.constant 0 : i32
    return %arg0, %c0_i32, %arg1 : i32, i32, i32
  }
  func.func @transform_3(%arg0: i32, %arg1: i32) -> (i32, i32, i32) {
    %c1_i32 = arith.constant 1 : i32
    %0 = arith.addi %arg1, %c1_i32 : i32
    %c2_i32 = arith.constant 2 : i32
    %1 = arith.muli %0, %c2_i32 : i32
    %c0_i32 = arith.constant 0 : i32
    %c0_i32_0 = arith.constant 0 : i32
    return %arg0, %c0_i32, %1 : i32, i32, i32
  }
  func.func @transform_4(%arg0: i32, %arg1: i32) -> (i32, i32, i32) {
    %c0_i32 = arith.constant 0 : i32
    %c0_i32_0 = arith.constant 0 : i32
    return %arg0, %c0_i32, %arg1 : i32, i32, i32
  }
}

</mosaic_0001>

<llo_original>
// kernel: tpu_custom_call.1
$region0: #{tpu_custom_call.1}
  #allocation0 [shape = 'u32[]', space=smem, size = 0x4, offset = 0x4, fixed_abs, tag = 'smem constant byte address 0x4 - core index']
  #allocation1 [shape = 'u32[72,128]{1,0:T(1,128)}', space=vmem, size = 0x9000, scoped, tag = 'internal scratch']
  #allocation2 [shape = 'f32[72,256]{1,0:T(8,128)}', space=vmem, size = 0x12000, scoped, tag = 'scratch operand']
  %s0 = inlined_call_operand.vmem [shape: f32[8,72], index: 0, kind: input, shape index: {}]
  %s1 = inlined_call_operand.vmem [shape: f32[8,1], index: 1, kind: input, shape index: {}]
  %s2 = inlined_call_operand.hbm [shape: f32[2,8,384], index: 2, kind: input, shape index: {}]
  %s3 = inlined_call_operand.hbm [shape: f32[2,8,384], index: 3, kind: input, shape index: {}]
  %s4 = inlined_call_operand.hbm [shape: f32[2,8,256], index: 4, kind: output, shape index: {}]
  %s5 = sld [smem:[#allocation0]]
  $region57: #{tpu_custom_call.1} parent=0
    _
  %s7 = ssub.s32 1, %s5
  %s8 = scalar_select 0, %s7, %s5
  $region1: #{tpu_custom_call.1} parent=0
    #allocation3 [shape = 'u8[16384]{0}', space=vmem, size = 0x4000, scoped, tag = 'input window, operand 2']
    #allocation4 [shape = 's32[2]{0}', space=sflag, size = 0x8, scoped, tag = 'scoped memory for tpu_custom_call.1']
    #allocation5 [shape = 's32[2]{0}', space=sflag, size = 0x8, scoped, tag = 'scoped memory for tpu_custom_call.1']
    #allocation6 [shape = 'u8[8192]{0}', space=vmem, size = 0x2000, scoped, tag = 'input window, operand 3']
    #allocation7 [shape = 's32[2]{0}', space=sflag, size = 0x8, scoped, tag = 'scoped memory for tpu_custom_call.1']
    #allocation8 [shape = 'u8[16384]{0}', space=vmem, size = 0x4000, scoped, tag = 'output window, operand 0']
    %9 = vsyncpa [#allocation4], 0
    %s10 = scalar_lea.sflag [#allocation4], 1
    %11 = vsyncpa %s10, 0
    %12 = vsyncpa [#allocation7], 0
    %s13 = scalar_lea.sflag [#allocation7], 1
    %14 = vsyncpa %s13, 0
    %15 = vsyncpa [#allocation5], 0
    %s16 = scalar_lea.sflag [#allocation5], 1
    %17 = vsyncpa %s16, 0
    loop: start=0, step=1, limit=4
    $region2: #{tpu_custom_call.1} parent=1 // loop_pre_header
      _
    $region3: #{tpu_custom_call.1} parent=1 // loop_header
      %s19 = sphi 0, %s23
      %p20 = scmp.ge.s32.totalorder %s19, 4
      %s26 = sphi 0, %s38
      %s27 = sphi 0, %s34
      %s28 = sphi 0, %s26
      %s29 = sphi 0, %s27
      %s30 = sphi 0, %s28
      %s31 = sphi 0, %s29
      %s39 = sphi 0, %s39
      %s41 = sphi 0, %s39
      %s42 = sphi 0, %s41
      %s56 = sphi 0, %s42
      %s60 = sphi 0, %s60
      %s62 = sphi 0, %s60
      %s63 = sphi 0, %s62
      %s77 = sphi 0, %s63
      %s85 = sphi 0, %s87
      %s88 = sphi 0, %s85
      %s89 = sphi 0, %s88
      %s105 = sphi 0, %s89
      %s117 = sphi 0, %s119
      %s120 = sphi 0, %s117
      %s121 = sphi 0, %s120
      %s137 = sphi 0, %s121
      %s145 = sphi 0, %s147
      %s148 = sphi 0, %s145
      %s149 = sphi 0, %s148
      %s165 = sphi 0, %s149
    $region4: #{tpu_custom_call.1} parent=1 // loop_header_branch
      %22 = sbr.rel (%p20) target = $region8
    $region5: #{tpu_custom_call.1} parent=1 // loop_body
      %s24 = ssub.s32 %s19, 1
      %s25 = ssub.s32 %s19, 2
      %s32 = sadd.s32 1, %s27
      %p33 = scmp.ge.s32.totalorder %s32, 1
      %s34 = scalar_select %p33, 0, %s32
      %s35 = sadd.s32 1, %s26
      %s36 = scalar_select %p33, %s35, %s26
      %p37 = scmp.ge.s32.totalorder %s36, 2
      %s38 = scalar_select %p37, 0, %s36
      %s40 = sadd.s32 %s39, 1
      %p43 = scmp.eq.s32.totalorder %s19, 1
      %p44 = scmp.ne.s32.totalorder %s39, %s41
      %p45 = scmp.eq.s32.totalorder %s19, 0
      %p46 = por %p44, %p45
      %p47 = scmp.ne.s32.totalorder %s39, %s41
      %p48 = scmp.eq.s32.totalorder %s24, 1
      %p49 = por %p47, %p48
      %p50 = scmp.ne.s32.totalorder %s41, %s42
      %p51 = scmp.eq.s32.totalorder %s24, 0
      %p52 = por %p50, %p51
      %p53 = scmp.ne.s32.totalorder %s41, %s42
      %p54 = scmp.eq.s32.totalorder %s25, 1
      %p55 = por %p53, %p54
      %p57 = scmp.ne.s32.totalorder %s42, %s56
      %p58 = scmp.eq.s32.totalorder %s25, 0
      %p59 = por %p57, %p58
      %s61 = sadd.s32 %s60, 1
      %p64 = scmp.eq.s32.totalorder %s19, 1
      %p65 = scmp.ne.s32.totalorder %s60, %s62
      %p66 = scmp.eq.s32.totalorder %s19, 0
      %p67 = por %p65, %p66
      %p68 = scmp.ne.s32.totalorder %s60, %s62
      %p69 = scmp.eq.s32.totalorder %s24, 1
      %p70 = por %p68, %p69
      %p71 = scmp.ne.s32.totalorder %s62, %s63
      %p72 = scmp.eq.s32.totalorder %s24, 0
      %p73 = por %p71, %p72
      %p74 = scmp.ne.s32.totalorder %s62, %s63
      %p75 = scmp.eq.s32.totalorder %s25, 1
      %p76 = por %p74, %p75
      %p78 = scmp.ne.s32.totalorder %s63, %s77
      %p79 = scmp.eq.s32.totalorder %s25, 0
      %p80 = por %p78, %p79
      %s81 = ssub.s32 %s26, %s38
      %s82 = ssub.s32 %s27, %s34
      %s83 = sor.u32 %s81, %s82
      %p84 = scmp.eq.s32.totalorder %s83, 0
      %s86 = sadd.s32 %s85, 1
      %s87 = scalar_select %p84, %s85, %s86
      %p90 = pneg %p84
      %p91 = scmp.eq.s32.totalorder %s19, 1
      %p92 = por %p90, %p91
      %p93 = scmp.ne.s32.totalorder %s85, %s88
      %p94 = scmp.eq.s32.totalorder %s19, 0
      %p95 = por %p93, %p94
      %p96 = scmp.ne.s32.totalorder %s85, %s88
      %p97 = scmp.eq.s32.totalorder %s24, 1
      %p98 = por %p96, %p97
      %p99 = scmp.ne.s32.totalorder %s88, %s89
      %p100 = scmp.eq.s32.totalorder %s24, 0
      %p101 = por %p99, %p100
      %p102 = scmp.ne.s32.totalorder %s88, %s89
      %p103 = scmp.eq.s32.totalorder %s25, 1
      %p104 = por %p102, %p103
      %p106 = scmp.ne.s32.totalorder %s89, %s105
      %p107 = scmp.eq.s32.totalorder %s25, 0
      %p108 = por %p106, %p107
      %s109 = sadd.s32 %s27, 1
      %s110 = smul.u32 %s109, 2
      %s111 = sadd.s32 %s34, 1
      %s112 = smul.u32 %s111, 2
      %s113 = ssub.s32 %s26, %s38
      %s114 = ssub.s32 %s110, %s112
      %s115 = sor.u32 %s113, %s114
      %p116 = scmp.eq.s32.totalorder %s115, 0
      %s118 = sadd.s32 %s117, 1
      %s119 = scalar_select %p116, %s117, %s118
      %p122 = pneg %p116
      %p123 = scmp.eq.s32.totalorder %s19, 1
      %p124 = por %p122, %p123
      %p125 = scmp.ne.s32.totalorder %s117, %s120
      %p126 = scmp.eq.s32.totalorder %s19, 0
      %p127 = por %p125, %p126
      %p128 = scmp.ne.s32.totalorder %s117, %s120
      %p129 = scmp.eq.s32.totalorder %s24, 1
      %p130 = por %p128, %p129
      %p131 = scmp.ne.s32.totalorder %s120, %s121
      %p132 = scmp.eq.s32.totalorder %s24, 0
      %p133 = por %p131, %p132
      %p134 = scmp.ne.s32.totalorder %s120, %s121
      %p135 = scmp.eq.s32.totalorder %s25, 1
      %p136 = por %p134, %p135
      %p138 = scmp.ne.s32.totalorder %s121, %s137
      %p139 = scmp.eq.s32.totalorder %s25, 0
      %p140 = por %p138, %p139
      %s141 = ssub.s32 %s26, %s38
      %s142 = ssub.s32 %s27, %s34
      %s143 = sor.u32 %s141, %s142
      %p144 = scmp.eq.s32.totalorder %s143, 0
      %s146 = sadd.s32 %s145, 1
      %s147 = scalar_select %p144, %s145, %s146
      %p150 = pneg %p144
      %p151 = scmp.eq.s32.totalorder %s19, 1
      %p152 = por %p150, %p151
      %p153 = scmp.ne.s32.totalorder %s145, %s148
      %p154 = scmp.eq.s32.totalorder %s19, 0
      %p155 = por %p153, %p154
      %p156 = scmp.ne.s32.totalorder %s145, %s148
      %p157 = scmp.eq.s32.totalorder %s24, 1
      %p158 = por %p156, %p157
      %p159 = scmp.ne.s32.totalorder %s148, %s149
      %p160 = scmp.eq.s32.totalorder %s24, 0
      %p161 = por %p159, %p160
      %p162 = scmp.ne.s32.totalorder %s148, %s149
      %p163 = scmp.eq.s32.totalorder %s25, 1
      %p164 = por %p162, %p163
      %p166 = scmp.ne.s32.totalorder %s149, %s165
      %p167 = scmp.eq.s32.totalorder %s25, 0
      %p168 = por %p166, %p167
      %p169 = scmp.le.s32.totalorder 1, %s19
      %p170 = scmp.lt.s32.totalorder %s19, 3
      %p171 = pnand %p169, %p170
      %p172 = pneg %p171
      // Predicated region
      $region9: #{tpu_custom_call.1} parent=5 // pred_check
        _
      $region10: #{tpu_custom_call.1} parent=5 // pred_check_branch
        %174 = sbr.rel (%p171) target = $region12
      $region11: #{tpu_custom_call.1} parent=5 // pred_region
        %s175 = ssub.s32 %s19, 1
        // Predicated region
        $region13: #{tpu_custom_call.1} parent=11 // pred_check
          %p176 = pneg %p52
        $region14: #{tpu_custom_call.1} parent=11 // pred_check_branch
          %178 = sbr.rel (%p176) target = $region16
        $region15: #{tpu_custom_call.1} parent=11 // pred_region
          _
        $region16: #{tpu_custom_call.1} parent=11 // pred_fallthru
          _
        // Predicated region
        $region17: #{tpu_custom_call.1} parent=11 // pred_check
          %p179 = pneg %p73
        $region18: #{tpu_custom_call.1} parent=11 // pred_check_branch
          %181 = sbr.rel (%p179) target = $region20
        $region19: #{tpu_custom_call.1} parent=11 // pred_region
          _
        $region20: #{tpu_custom_call.1} parent=11 // pred_fallthru
          _
      $region12: #{tpu_custom_call.1} parent=5 // pred_fallthru
        _
      %p182 = scmp.lt.s32.totalorder %s19, 2
      // Predicated region
      $region21: #{tpu_custom_call.1} parent=5 // pred_check
        %p183 = pneg %p182
      $region22: #{tpu_custom_call.1} parent=5 // pred_check_branch
        %185 = sbr.rel (%p183) target = $region24
      $region23: #{tpu_custom_call.1} parent=5 // pred_region
        // Predicated region
        $region25: #{tpu_custom_call.1} parent=23 // pred_check
          %p186 = pneg %p95
        $region26: #{tpu_custom_call.1} parent=23 // pred_check_branch
          %188 = sbr.rel (%p186) target = $region28
        $region27: #{tpu_custom_call.1} parent=23 // pred_region
          %s189 = sand.u32 %s85, 1
          %s190 = scalar_lea.sflag [#allocation4], %s189
          %s191 = sand.u32 %s85, 1
          %s192 = smul.addr %s191, 16
          %s193 = scalar_lea.vmem [#allocation3], %s192
          %s194 = smul.u32 2, %s27
          %s195 = ssub.s32 3, %s194
          %p196 = scmp.lt.s32.totalorder %s195, 2
          %s197 = scalar_select %p196, %s195, 2
          %s198 = smul.u32 8, %s197
          %s199 = ssub.s32 16, %s198
          %s200 = sshll.u32 %s199, 4
          %201 = vsyncadd %s190, %s200
          %p202 = scmp.ne.s32.totalorder 0, %s198
          %s203 = smul.addr %s26, 3
          %s204 = sadd.s32 %s194, %s203
          %s205 = smul.addr %s204, 8
          %s206 = scalar_lea.hbm %s2, %s205
          %s207 = smul.u32 %s197, 8
          %s208 = sshll.u32 %s207, 4
          %s209 = sshll.u32 %s206, 4
          %s210 = int_to_ptr.hbm [resolvable:$true] %s209
          %s211 = sshll.u32 %s193, 4
          %s212 = int_to_ptr.vmem [resolvable:$true] %s211
          %214 = dma.hbm_to_vmem [thread:$0]  (%p202), %s210, %s208, %s212, %s190
        $region28: #{tpu_custom_call.1} parent=23 // pred_fallthru
          _
        // Predicated region
        $region29: #{tpu_custom_call.1} parent=23 // pred_check
          %p215 = pneg %p127
        $region30: #{tpu_custom_call.1} parent=23 // pred_check_branch
          %217 = sbr.rel (%p215) target = $region32
        $region31: #{tpu_custom_call.1} parent=23 // pred_region
          %s218 = sand.u32 %s117, 1
          %s219 = scalar_lea.sflag [#allocation7], %s218
          %s220 = sand.u32 %s117, 1
          %s221 = smul.addr %s220, 8
          %s222 = scalar_lea.vmem [#allocation6], %s221
          %s223 = sadd.s32 %s27, 1
          %s224 = smul.u32 %s223, 2
          %226 = vsyncadd %s219, 0
          %s227 = smul.addr %s26, 3
          %s228 = sadd.s32 %s224, %s227
          %s229 = smul.addr %s228, 8
          %s230 = scalar_lea.hbm %s3, %s229
          %s232 = sshll.u32 %s230, 4
          %s233 = int_to_ptr.hbm [resolvable:$true] %s232
          %s234 = sshll.u32 %s222, 4
          %s235 = int_to_ptr.vmem [resolvable:$true] %s234
          %237 = dma.hbm_to_vmem [thread:$0]  %s233, 128, %s235, %s219
        $region32: #{tpu_custom_call.1} parent=23 // pred_fallthru
          _
      $region24: #{tpu_custom_call.1} parent=5 // pred_fallthru
        _
      %p238 = scmp.le.s32.totalorder 1, %s19
      %p239 = scmp.lt.s32.totalorder %s19, 3
      %p240 = pnand %p238, %p239
      %p241 = pneg %p240
      // Predicated region
      $region33: #{tpu_custom_call.1} parent=5 // pred_check
        _
      $region34: #{tpu_custom_call.1} parent=5 // pred_check_branch
        %243 = sbr.rel (%p240) target = $region36
      $region35: #{tpu_custom_call.1} parent=5 // pred_region
        %s244 = ssub.s32 %s19, 1
        %s245 = sand.u32 %s88, 1
        %s246 = scalar_lea.sflag [#allocation4], %s245
        %s247 = sand.u32 %s88, 1
        %s248 = smul.addr %s247, 16
        %s249 = scalar_lea.vmem [#allocation3], %s248
        // Predicated region
        $region37: #{tpu_custom_call.1} parent=35 // pred_check
          %p250 = pneg %p101
        $region38: #{tpu_custom_call.1} parent=35 // pred_check_branch
          %252 = sbr.rel (%p250) target = $region40
        $region39: #{tpu_custom_call.1} parent=35 // pred_region
          %254 = dma.done %s246, 256
        $region40: #{tpu_custom_call.1} parent=35 // pred_fallthru
          _
        %s255 = sand.u32 %s120, 1
        %s256 = scalar_lea.sflag [#allocation7], %s255
        %s257 = sand.u32 %s120, 1
        %s258 = smul.addr %s257, 8
        %s259 = scalar_lea.vmem [#allocation6], %s258
        // Predicated region
        $region41: #{tpu_custom_call.1} parent=35 // pred_check
          %p260 = pneg %p133
        $region42: #{tpu_custom_call.1} parent=35 // pred_check_branch
          %262 = sbr.rel (%p260) target = $region44
        $region43: #{tpu_custom_call.1} parent=35 // pred_region
          %264 = dma.done %s256, 128
        $region44: #{tpu_custom_call.1} parent=35 // pred_fallthru
          _
        %p265 = pneg %p52
        %p266 = pneg %p49
        %p267 = pneg %p73
        %p268 = pneg %p70
        %s269 = sand.u32 %s88, 1
        %s270 = scalar_lea.sflag [#allocation4], %s269
        %s271 = sand.u32 %s88, 1
        %s272 = smul.addr %s271, 16
        %s273 = scalar_lea.vmem [#allocation3], %s272
        %p274 = pneg %p101
        %p275 = pneg %p98
        %s276 = sand.u32 %s120, 1
        %s277 = scalar_lea.sflag [#allocation7], %s276
        %s278 = sand.u32 %s120, 1
        %s279 = smul.addr %s278, 8
        %s280 = scalar_lea.vmem [#allocation6], %s279
        %p281 = pneg %p133
        %p282 = pneg %p130
        %p283 = pneg %p161
        %p284 = pneg %p158
        %s285 = sand.u32 %s148, 1
        %s286 = scalar_lea.sflag [#allocation5], %s285
        %s287 = sand.u32 %s148, 1
        %s288 = smul.addr %s287, 16
        %s289 = scalar_lea.vmem [#allocation8], %s288
        %s290 = smul.u32 2, %s29
        %s291 = ssub.s32 3, %s290
        %p292 = scmp.lt.s32.totalorder %s291, 2
        %s293 = scalar_select %p292, %s291, 2
        %s294 = smul.u32 8, %s293
        %s295 = sadd.s32 %s29, 1
        %s296 = smul.u32 %s295, 2
        %s297 = smul.u32 2, %s29
        %v298 = vld [vmem:[%s249] sm:$0xff]
        %v299 = vld [vmem:[%s249 + $0x8] sm:$0xff]
        %300 = vst [vmem:[#allocation2] sm:$0xff] %v298
        %301 = vst [vmem:[#allocation2 + $0x8] sm:$0xff] %v299
        %v302 = vld [vmem:[%s249] sm:$0xff]
        %v303 = vld [vmem:[%s249 + $0x8] sm:$0xff]
        %306 = vrot.lane.b32.xlu0 %v302, 127
        %v307 = vpop.permute.xlu0 %306
        %308 = vrot.lane.b32.xlu0 %v303, 127
        %v309 = vpop.permute.xlu0 %308
        %vm310 = vcmask 1039360
        %v311 = vsel %vm310, %v307, %v309
        %314 = vst [vmem:[#allocation2 + $0x10] sm:$0xff] %v311
        %315 = vst.msk [vmem:[#allocation2 + $0x18] sm:$0xff] %vm310, %v309
        %v316 = vld [vmem:[%s259] sm:$0xff]
        %318 = vrot.lane.b32.xlu0 %v316, 127
        %v319 = vpop.permute.xlu0 %318
        %vm321 = vcmask 1048568
        %322 = vst.msk [vmem:[#allocation2 + $0x18] sm:$0xff] %vm321, %v319
        %v323 = vld [vmem:[%s249] sm:$0xff]
        %v324 = vld [vmem:[%s249 + $0x8] sm:$0xff]
        %327 = vrot.lane.b32.xlu0 %v323, 126
        %v328 = vpop.permute.xlu0 %327
        %329 = vrot.lane.b32.xlu0 %v324, 126
        %v330 = vpop.permute.xlu0 %329
        %vm331 = vcmask 1031168
        %v332 = vsel %vm331, %v328, %v330
        %335 = vst [vmem:[#allocation2 + $0x20] sm:$0xff] %v332
        %336 = vst.msk [vmem:[#allocation2 + $0x28] sm:$0xff] %vm331, %v330
        %v337 = vld [vmem:[%s259] sm:$0xff]
        %339 = vrot.lane.b32.xlu0 %v337, 126
        %v340 = vpop.permute.xlu0 %339
        %vm342 = vcmask 1048560
        %343 = vst.msk [vmem:[#allocation2 + $0x28] sm:$0xff] %vm342, %v340
        %v344 = vld [vmem:[%s249] sm:$0xff]
        %v345 = vld [vmem:[%s249 + $0x8] sm:$0xff]
        %348 = vrot.lane.b32.xlu0 %v344, 112
        %v349 = vpop.permute.xlu0 %348
        %350 = vrot.lane.b32.xlu0 %v345, 112
        %v351 = vpop.permute.xlu0 %350
        %vm352 = vcmask 916480
        %v353 = vsel %vm352, %v349, %v351
        %356 = vst [vmem:[#allocation2 + $0x30] sm:$0xff] %v353
        %357 = vst.msk [vmem:[#allocation2 + $0x38] sm:$0xff] %vm352, %v351
        %v358 = vld [vmem:[%s259] sm:$0xff]
        %360 = vrot.lane.b32.xlu0 %v358, 112
        %v361 = vpop.permute.xlu0 %360
        %vm363 = vcmask 1048448
        %364 = vst.msk [vmem:[#allocation2 + $0x38] sm:$0xff] %vm363, %v361
        %v365 = vld [vmem:[%s249] sm:$0xff]
        %v366 = vld [vmem:[%s249 + $0x8] sm:$0xff]
        %369 = vrot.lane.b32.xlu0 %v365, 111
        %v370 = vpop.permute.xlu0 %369
        %371 = vrot.lane.b32.xlu0 %v366, 111
        %v372 = vpop.permute.xlu0 %371
        %vm373 = vcmask 908288
        %v374 = vsel %vm373, %v370, %v372
        %377 = vst [vmem:[#allocation2 + $0x40] sm:$0xff] %v374
        %378 = vst.msk [vmem:[#allocation2 + $0x48] sm:$0xff] %vm373, %v372
        %v379 = vld [vmem:[%s259] sm:$0xff]
        %381 = vrot.lane.b32.xlu0 %v379, 111
        %v382 = vpop.permute.xlu0 %381
        %vm384 = vcmask 1048440
        %385 = vst.msk [vmem:[#allocation2 + $0x48] sm:$0xff] %vm384, %v382
        %v386 = vld [vmem:[%s249] sm:$0xff]
        %v387 = vld [vmem:[%s249 + $0x8] sm:$0xff]
        %390 = vrot.lane.b32.xlu0 %v386, 110
        %v391 = vpop.permute.xlu0 %390
        %392 = vrot.lane.b32.xlu0 %v387, 110
        %v393 = vpop.permute.xlu0 %392
        %vm394 = vcmask 900096
        %v395 = vsel %vm394, %v391, %v393
        %398 = vst [vmem:[#allocation2 + $0x50] sm:$0xff] %v395
        %399 = vst.msk [vmem:[#allocation2 + $0x58] sm:$0xff] %vm394, %v393
        %v400 = vld [vmem:[%s259] sm:$0xff]
        %402 = vrot.lane.b32.xlu0 %v400, 110
        %v403 = vpop.permute.xlu0 %402
        %vm405 = vcmask 1048432
        %406 = vst.msk [vmem:[#allocation2 + $0x58] sm:$0xff] %vm405, %v403
        %v407 = vld [vmem:[%s249] sm:$0xff]
        %v408 = vld [vmem:[%s249 + $0x8] sm:$0xff]
        %411 = vrot.lane.b32.xlu0 %v407, 96
        %v412 = vpop.permute.xlu0 %411
        %413 = vrot.lane.b32.xlu0 %v408, 96
        %v414 = vpop.permute.xlu0 %413
        %vm415 = vcmask 785408
        %v416 = vsel %vm415, %v412, %v414
        %419 = vst [vmem:[#allocation2 + $0x60] sm:$0xff] %v416
        %420 = vst.msk [vmem:[#allocation2 + $0x68] sm:$0xff] %vm415, %v414
        %v421 = vld [vmem:[%s259] sm:$0xff]
        %423 = vrot.lane.b32.xlu0 %v421, 96
        %v424 = vpop.permute.xlu0 %423
        %vm426 = vcmask 1048320
        %427 = vst.msk [vmem:[#allocation2 + $0x68] sm:$0xff] %vm426, %v424
        %v428 = vld [vmem:[%s249] sm:$0xff]
        %v429 = vld [vmem:[%s249 + $0x8] sm:$0xff]
        %432 = vrot.lane.b32.xlu0 %v428, 95
        %v433 = vpop.permute.xlu0 %432
        %434 = vrot.lane.b32.xlu0 %v429, 95
        %v435 = vpop.permute.xlu0 %434
        %vm436 = vcmask 777216
        %v437 = vsel %vm436, %v433, %v435
        %440 = vst [vmem:[#allocation2 + $0x70] sm:$0xff] %v437
        %441 = vst.msk [vmem:[#allocation2 + $0x78] sm:$0xff] %vm436, %v435
        %v442 = vld [vmem:[%s259] sm:$0xff]
        %444 = vrot.lane.b32.xlu0 %v442, 95
        %v445 = vpop.permute.xlu0 %444
        %vm447 = vcmask 1048312
        %448 = vst.msk [vmem:[#allocation2 + $0x78] sm:$0xff] %vm447, %v445
        %v449 = vld [vmem:[%s249] sm:$0xff]
        %v450 = vld [vmem:[%s249 + $0x8] sm:$0xff]
        %453 = vrot.lane.b32.xlu0 %v449, 94
        %v454 = vpop.permute.xlu0 %453
        %455 = vrot.lane.b32.xlu0 %v450, 94
        %v456 = vpop.permute.xlu0 %455
        %vm457 = vcmask 769024
        %v458 = vsel %vm457, %v454, %v456
        %461 = vst [vmem:[#allocation2 + $0x80] sm:$0xff] %v458
        %462 = vst.msk [vmem:[#allocation2 + $0x88] sm:$0xff] %vm457, %v456
        %v463 = vld [vmem:[%s259] sm:$0xff]
        %465 = vrot.lane.b32.xlu0 %v463, 94
        %v466 = vpop.permute.xlu0 %465
        %vm468 = vcmask 1048304
        %469 = vst.msk [vmem:[#allocation2 + $0x88] sm:$0xff] %vm468, %v466
        %v470 = vld [vmem:[%s0] sm:$0xff]
        %v471 = vld [vmem:[#allocation2] sm:$0xff]
        %v472 = vld [vmem:[#allocation2 + $0x8] sm:$0xff]
        %v473 = vld [vmem:[#allocation2 + $0x10] sm:$0xff]
        %v474 = vld [vmem:[#allocation2 + $0x18] sm:$0xff]
        %v475 = vld [vmem:[#allocation2 + $0x20] sm:$0xff]
        %v476 = vld [vmem:[#allocation2 + $0x28] sm:$0xff]
        %v477 = vld [vmem:[#allocation2 + $0x30] sm:$0xff]
        %v478 = vld [vmem:[#allocation2 + $0x38] sm:$0xff]
        %v479 = vld [vmem:[#allocation2 + $0x40] sm:$0xff]
        %v480 = vld [vmem:[#allocation2 + $0x48] sm:$0xff]
        %v481 = vld [vmem:[#allocation2 + $0x50] sm:$0xff]
        %v482 = vld [vmem:[#allocation2 + $0x58] sm:$0xff]
        %v483 = vld [vmem:[#allocation2 + $0x60] sm:$0xff]
        %v484 = vld [vmem:[#allocation2 + $0x68] sm:$0xff]
        %v485 = vld [vmem:[#allocation2 + $0x70] sm:$0xff]
        %v486 = vld [vmem:[#allocation2 + $0x78] sm:$0xff]
        %v487 = vld [vmem:[#allocation2 + $0x80] sm:$0xff]
        %v488 = vld [vmem:[#allocation2 + $0x88] sm:$0xff]
        %v489 = vld [vmem:[%s1] sm:$0xff]
        %491 = vset.pattern.permute.xlu0 0
        %492 = vperm.xlu0 %491, %v489
        %v493 = vpop.permute.xlu0 %492
        %vm495 = vcmask 588800
        %v497 = vsel %vm495, %v470, 0
        %499 = vmatpush.msra.mxu0 0.0
        %500 = vmatpush.msra.mxu0 0.0
        %501 = vmatpush.msra.mxu0 0.0
        %502 = vmatpush.msra.mxu0 0.0
        %503 = vmatpush.msra.mxu0 0.0
        %504 = vmatpush.msra.mxu0 0.0
        %505 = vmatpush.msra.mxu0 0.0
        %v506 = vand.u32 %v487, 4294901760
        %507 = vmatpush.msra.mxu0 %v506
        %v508 = vand.u32 %v485, 4294901760
        %509 = vmatpush.msra.mxu0 %v508
        %v510 = vand.u32 %v483, 4294901760
        %511 = vmatpush.msra.mxu0 %v510
        %v512 = vand.u32 %v481, 4294901760
        %513 = vmatpush.msra.mxu0 %v512
        %v514 = vand.u32 %v479, 4294901760
        %515 = vmatpush.msra.mxu0 %v514
        %v516 = vand.u32 %v477, 4294901760
        %517 = vmatpush.msra.mxu0 %v516
        %v518 = vand.u32 %v475, 4294901760
        %519 = vmatpush.msra.mxu0 %v518
        %v520 = vand.u32 %v473, 4294901760
        %521 = vmatpush.msra.mxu0 %v520
        %v522 = vand.u32 %v471, 4294901760
        %523 = vmatpush.msra.mxu0 %v522
        %v524 = vand.u32 %v497, 4294901760
        %v525 = vsub.f32 %v497, %v524
        %v526 = vand.u32 %v525, 4294901760
        %v527 = vsub.f32 %v525, %v526
        %v528 = vand.u32 %v527, 4294901760
        %529 = vmatmul.f32.gmra.mxu0 %v528
        %v530 = vpop.f32.mrf.mxu0
        %v531 = vadd.f32 %v493, %v530
        %532 = vdwg.mxu0
        %533 = vmatpush.msra.mxu0 0.0
        %534 = vmatpush.msra.mxu0 0.0
        %535 = vmatpush.msra.mxu0 0.0
        %536 = vmatpush.msra.mxu0 0.0
        %537 = vmatpush.msra.mxu0 0.0
        %538 = vmatpush.msra.mxu0 0.0
        %539 = vmatpush.msra.mxu0 0.0
        %v540 = vand.u32 %v487, 4294901760
        %v541 = vsub.f32 %v487, %v540
        %v542 = vand.u32 %v541, 4294901760
        %v543 = vsub.f32 %v541, %v542
        %v544 = vand.u32 %v543, 4294901760
        %545 = vmatpush.msra.mxu0 %v544
        %v546 = vand.u32 %v485, 4294901760
        %v547 = vsub.f32 %v485, %v546
        %v548 = vand.u32 %v547, 4294901760
        %v549 = vsub.f32 %v547, %v548
        %v550 = vand.u32 %v549, 4294901760
        %551 = vmatpush.msra.mxu0 %v550
        %v552 = vand.u32 %v483, 4294901760
        %v553 = vsub.f32 %v483, %v552
        %v554 = vand.u32 %v553, 4294901760
        %v555 = vsub.f32 %v553, %v554
        %v556 = vand.u32 %v555, 4294901760
        %557 = vmatpush.msra.mxu0 %v556
        %v558 = vand.u32 %v481, 4294901760
        %v559 = vsub.f32 %v481, %v558
        %v560 = vand.u32 %v559, 4294901760
        %v561 = vsub.f32 %v559, %v560
        %v562 = vand.u32 %v561, 4294901760
        %563 = vmatpush.msra.mxu0 %v562
        %v564 = vand.u32 %v479, 4294901760
        %v565 = vsub.f32 %v479, %v564
        %v566 = vand.u32 %v565, 4294901760
        %v567 = vsub.f32 %v565, %v566
        %v568 = vand.u32 %v567, 4294901760
        %569 = vmatpush.msra.mxu0 %v568
        %v570 = vand.u32 %v477, 4294901760
        %v571 = vsub.f32 %v477, %v570
        %v572 = vand.u32 %v571, 4294901760
        %v573 = vsub.f32 %v571, %v572
        %v574 = vand.u32 %v573, 4294901760
        %575 = vmatpush.msra.mxu0 %v574
        %v576 = vand.u32 %v475, 4294901760
        %v577 = vsub.f32 %v475, %v576
        %v578 = vand.u32 %v577, 4294901760
        %v579 = vsub.f32 %v577, %v578
        %v580 = vand.u32 %v579, 4294901760
        %581 = vmatpush.msra.mxu0 %v580
        %v582 = vand.u32 %v473, 4294901760
        %v583 = vsub.f32 %v473, %v582
        %v584 = vand.u32 %v583, 4294901760
        %v585 = vsub.f32 %v583, %v584
        %v586 = vand.u32 %v585, 4294901760
        %587 = vmatpush.msra.mxu0 %v586
        %v588 = vand.u32 %v471, 4294901760
        %v589 = vsub.f32 %v471, %v588
        %v590 = vand.u32 %v589, 4294901760
        %v591 = vsub.f32 %v589, %v590
        %v592 = vand.u32 %v591, 4294901760
        %593 = vmatpush.msra.mxu0 %v592
        %v594 = vand.u32 %v497, 4294901760
        %595 = vmatmul.f32.gmra.mxu0 %v594
        %v596 = vpop.f32.mrf.mxu0
        %v597 = vadd.f32 %v531, %v596
        %598 = vdwg.mxu0
        %599 = vmatpush.msra.mxu0 0.0
        %600 = vmatpush.msra.mxu0 0.0
        %601 = vmatpush.msra.mxu0 0.0
        %602 = vmatpush.msra.mxu0 0.0
        %603 = vmatpush.msra.mxu0 0.0
        %604 = vmatpush.msra.mxu0 0.0
        %605 = vmatpush.msra.mxu0 0.0
        %v606 = vand.u32 %v487, 4294901760
        %v607 = vsub.f32 %v487, %v606
        %608 = vmatpush.msra.mxu0 %v607
        %v609 = vand.u32 %v485, 4294901760
        %v610 = vsub.f32 %v485, %v609
        %611 = vmatpush.msra.mxu0 %v610
        %v612 = vand.u32 %v483, 4294901760
        %v613 = vsub.f32 %v483, %v612
        %614 = vmatpush.msra.mxu0 %v613
        %v615 = vand.u32 %v481, 4294901760
        %v616 = vsub.f32 %v481, %v615
        %617 = vmatpush.msra.mxu0 %v616
        %v618 = vand.u32 %v479, 4294901760
        %v619 = vsub.f32 %v479, %v618
        %620 = vmatpush.msra.mxu0 %v619
        %v621 = vand.u32 %v477, 4294901760
        %v622 = vsub.f32 %v477, %v621
        %623 = vmatpush.msra.mxu0 %v622
        %v624 = vand.u32 %v475, 4294901760
        %v625 = vsub.f32 %v475, %v624
        %626 = vmatpush.msra.mxu0 %v625
        %v627 = vand.u32 %v473, 4294901760
        %v628 = vsub.f32 %v473, %v627
        %629 = vmatpush.msra.mxu0 %v628
        %v630 = vand.u32 %v471, 4294901760
        %v631 = vsub.f32 %v471, %v630
        %632 = vmatpush.msra.mxu0 %v631
        %v633 = vand.u32 %v497, 4294901760
        %v634 = vsub.f32 %v497, %v633
        %635 = vmatmul.f32.gmra.mxu0 %v634
        %v636 = vpop.f32.mrf.mxu0
        %v637 = vadd.f32 %v597, %v636
        %638 = vdwg.mxu0
        %639 = vmatpush.msra.mxu0 0.0
        %640 = vmatpush.msra.mxu0 0.0
        %641 = vmatpush.msra.mxu0 0.0
        %642 = vmatpush.msra.mxu0 0.0
        %643 = vmatpush.msra.mxu0 0.0
        %644 = vmatpush.msra.mxu0 0.0
        %645 = vmatpush.msra.mxu0 0.0
        %v646 = vand.u32 %v487, 4294901760
        %647 = vmatpush.msra.mxu0 %v646
        %v648 = vand.u32 %v485, 4294901760
        %649 = vmatpush.msra.mxu0 %v648
        %v650 = vand.u32 %v483, 4294901760
        %651 = vmatpush.msra.mxu0 %v650
        %v652 = vand.u32 %v481, 4294901760
        %653 = vmatpush.msra.mxu0 %v652
        %v654 = vand.u32 %v479, 4294901760
        %655 = vmatpush.msra.mxu0 %v654
        %v656 = vand.u32 %v477, 4294901760
        %657 = vmatpush.msra.mxu0 %v656
        %v658 = vand.u32 %v475, 4294901760
        %659 = vmatpush.msra.mxu0 %v658
        %v660 = vand.u32 %v473, 4294901760
        %661 = vmatpush.msra.mxu0 %v660
        %v662 = vand.u32 %v471, 4294901760
        %663 = vmatpush.msra.mxu0 %v662
        %v664 = vand.u32 %v497, 4294901760
        %v665 = vsub.f32 %v497, %v664
        %v666 = vand.u32 %v665, 4294901760
        %667 = vmatmul.f32.gmra.mxu0 %v666
        %v668 = vpop.f32.mrf.mxu0
        %v669 = vadd.f32 %v637, %v668
        %670 = vdwg.mxu0
        %671 = vmatpush.msra.mxu0 0.0
        %672 = vmatpush.msra.mxu0 0.0
        %673 = vmatpush.msra.mxu0 0.0
        %674 = vmatpush.msra.mxu0 0.0
        %675 = vmatpush.msra.mxu0 0.0
        %676 = vmatpush.msra.mxu0 0.0
        %677 = vmatpush.msra.mxu0 0.0
        %v678 = vand.u32 %v487, 4294901760
        %v679 = vsub.f32 %v487, %v678
        %v680 = vand.u32 %v679, 4294901760
        %681 = vmatpush.msra.mxu0 %v680
        %v682 = vand.u32 %v485, 4294901760
        %v683 = vsub.f32 %v485, %v682
        %v684 = vand.u32 %v683, 4294901760
        %685 = vmatpush.msra.mxu0 %v684
        %v686 = vand.u32 %v483, 4294901760
        %v687 = vsub.f32 %v483, %v686
        %v688 = vand.u32 %v687, 4294901760
        %689 = vmatpush.msra.mxu0 %v688
        %v690 = vand.u32 %v481, 4294901760
        %v691 = vsub.f32 %v481, %v690
        %v692 = vand.u32 %v691, 4294901760
        %693 = vmatpush.msra.mxu0 %v692
        %v694 = vand.u32 %v479, 4294901760
        %v695 = vsub.f32 %v479, %v694
        %v696 = vand.u32 %v695, 4294901760
        %697 = vmatpush.msra.mxu0 %v696
        %v698 = vand.u32 %v477, 4294901760
        %v699 = vsub.f32 %v477, %v698
        %v700 = vand.u32 %v699, 4294901760
        %701 = vmatpush.msra.mxu0 %v700
        %v702 = vand.u32 %v475, 4294901760
        %v703 = vsub.f32 %v475, %v702
        %v704 = vand.u32 %v703, 4294901760
        %705 = vmatpush.msra.mxu0 %v704
        %v706 = vand.u32 %v473, 4294901760
        %v707 = vsub.f32 %v473, %v706
        %v708 = vand.u32 %v707, 4294901760
        %709 = vmatpush.msra.mxu0 %v708
        %v710 = vand.u32 %v471, 4294901760
        %v711 = vsub.f32 %v471, %v710
        %v712 = vand.u32 %v711, 4294901760
        %713 = vmatpush.msra.mxu0 %v712
        %v714 = vand.u32 %v497, 4294901760
        %715 = vmatmul.f32.gmra.mxu0 %v714
        %v716 = vpop.f32.mrf.mxu0
        %v717 = vadd.f32 %v669, %v716
        %718 = vdwg.mxu0
        %719 = vmatpush.msra.mxu0 0.0
        %720 = vmatpush.msra.mxu0 0.0
        %721 = vmatpush.msra.mxu0 0.0
        %722 = vmatpush.msra.mxu0 0.0
        %723 = vmatpush.msra.mxu0 0.0
        %724 = vmatpush.msra.mxu0 0.0
        %725 = vmatpush.msra.mxu0 0.0
        %v726 = vand.u32 %v487, 4294901760
        %727 = vmatpush.msra.mxu0 %v726
        %v728 = vand.u32 %v485, 4294901760
        %729 = vmatpush.msra.mxu0 %v728
        %v730 = vand.u32 %v483, 4294901760
        %731 = vmatpush.msra.mxu0 %v730
        %v732 = vand.u32 %v481, 4294901760
        %733 = vmatpush.msra.mxu0 %v732
        %v734 = vand.u32 %v479, 4294901760
        %735 = vmatpush.msra.mxu0 %v734
        %v736 = vand.u32 %v477, 4294901760
        %737 = vmatpush.msra.mxu0 %v736
        %v738 = vand.u32 %v475, 4294901760
        %739 = vmatpush.msra.mxu0 %v738
        %v740 = vand.u32 %v473, 4294901760
        %741 = vmatpush.msra.mxu0 %v740
        %v742 = vand.u32 %v471, 4294901760
        %743 = vmatpush.msra.mxu0 %v742
        %v744 = vand.u32 %v497, 4294901760
        %745 = vmatmul.f32.gmra.mxu0 %v744
        %v746 = vpop.f32.mrf.mxu0
        %v747 = vadd.f32 %v717, %v746
        %748 = vdwg.mxu0
        %749 = vmatpush.msra.mxu0 0.0
        %750 = vmatpush.msra.mxu0 0.0
        %751 = vmatpush.msra.mxu0 0.0
        %752 = vmatpush.msra.mxu0 0.0
        %753 = vmatpush.msra.mxu0 0.0
        %754 = vmatpush.msra.mxu0 0.0
        %755 = vmatpush.msra.mxu0 0.0
        %v756 = vand.u32 %v488, 4294901760
        %757 = vmatpush.msra.mxu0 %v756
        %v758 = vand.u32 %v486, 4294901760
        %759 = vmatpush.msra.mxu0 %v758
        %v760 = vand.u32 %v484, 4294901760
        %761 = vmatpush.msra.mxu0 %v760
        %v762 = vand.u32 %v482, 4294901760
        %763 = vmatpush.msra.mxu0 %v762
        %v764 = vand.u32 %v480, 4294901760
        %765 = vmatpush.msra.mxu0 %v764
        %v766 = vand.u32 %v478, 4294901760
        %767 = vmatpush.msra.mxu0 %v766
        %v768 = vand.u32 %v476, 4294901760
        %769 = vmatpush.msra.mxu0 %v768
        %v770 = vand.u32 %v474, 4294901760
        %771 = vmatpush.msra.mxu0 %v770
        %v772 = vand.u32 %v472, 4294901760
        %773 = vmatpush.msra.mxu0 %v772
        %v774 = vand.u32 %v497, 4294901760
        %v775 = vsub.f32 %v497, %v774
        %v776 = vand.u32 %v775, 4294901760
        %v777 = vsub.f32 %v775, %v776
        %v778 = vand.u32 %v777, 4294901760
        %779 = vmatmul.f32.gmra.mxu0 %v778
        %v780 = vpop.f32.mrf.mxu0
        %v781 = vadd.f32 %v493, %v780
        %782 = vdwg.mxu0
        %783 = vmatpush.msra.mxu0 0.0
        %784 = vmatpush.msra.mxu0 0.0
        %785 = vmatpush.msra.mxu0 0.0
        %786 = vmatpush.msra.mxu0 0.0
        %787 = vmatpush.msra.mxu0 0.0
        %788 = vmatpush.msra.mxu0 0.0
        %789 = vmatpush.msra.mxu0 0.0
        %v790 = vand.u32 %v488, 4294901760
        %v791 = vsub.f32 %v488, %v790
        %v792 = vand.u32 %v791, 4294901760
        %v793 = vsub.f32 %v791, %v792
        %v794 = vand.u32 %v793, 4294901760
        %795 = vmatpush.msra.mxu0 %v794
        %v796 = vand.u32 %v486, 4294901760
        %v797 = vsub.f32 %v486, %v796
        %v798 = vand.u32 %v797, 4294901760
        %v799 = vsub.f32 %v797, %v798
        %v800 = vand.u32 %v799, 4294901760
        %801 = vmatpush.msra.mxu0 %v800
        %v802 = vand.u32 %v484, 4294901760
        %v803 = vsub.f32 %v484, %v802
        %v804 = vand.u32 %v803, 4294901760
        %v805 = vsub.f32 %v803, %v804
        %v806 = vand.u32 %v805, 4294901760
        %807 = vmatpush.msra.mxu0 %v806
        %v808 = vand.u32 %v482, 4294901760
        %v809 = vsub.f32 %v482, %v808
        %v810 = vand.u32 %v809, 4294901760
        %v811 = vsub.f32 %v809, %v810
        %v812 = vand.u32 %v811, 4294901760
        %813 = vmatpush.msra.mxu0 %v812
        %v814 = vand.u32 %v480, 4294901760
        %v815 = vsub.f32 %v480, %v814
        %v816 = vand.u32 %v815, 4294901760
        %v817 = vsub.f32 %v815, %v816
        %v818 = vand.u32 %v817, 4294901760
        %819 = vmatpush.msra.mxu0 %v818
        %v820 = vand.u32 %v478, 4294901760
        %v821 = vsub.f32 %v478, %v820
        %v822 = vand.u32 %v821, 4294901760
        %v823 = vsub.f32 %v821, %v822
        %v824 = vand.u32 %v823, 4294901760
        %825 = vmatpush.msra.mxu0 %v824
        %v826 = vand.u32 %v476, 4294901760
        %v827 = vsub.f32 %v476, %v826
        %v828 = vand.u32 %v827, 4294901760
        %v829 = vsub.f32 %v827, %v828
        %v830 = vand.u32 %v829, 4294901760
        %831 = vmatpush.msra.mxu0 %v830
        %v832 = vand.u32 %v474, 4294901760
        %v833 = vsub.f32 %v474, %v832
        %v834 = vand.u32 %v833, 4294901760
        %v835 = vsub.f32 %v833, %v834
        %v836 = vand.u32 %v835, 4294901760
        %837 = vmatpush.msra.mxu0 %v836
        %v838 = vand.u32 %v472, 4294901760
        %v839 = vsub.f32 %v472, %v838
        %v840 = vand.u32 %v839, 4294901760
        %v841 = vsub.f32 %v839, %v840
        %v842 = vand.u32 %v841, 4294901760
        %843 = vmatpush.msra.mxu0 %v842
        %v844 = vand.u32 %v497, 4294901760
        %845 = vmatmul.f32.gmra.mxu0 %v844
        %v846 = vpop.f32.mrf.mxu0
        %v847 = vadd.f32 %v781, %v846
        %848 = vdwg.mxu0
        %849 = vmatpush.msra.mxu0 0.0
        %850 = vmatpush.msra.mxu0 0.0
        %851 = vmatpush.msra.mxu0 0.0
        %852 = vmatpush.msra.mxu0 0.0
        %853 = vmatpush.msra.mxu0 0.0
        %854 = vmatpush.msra.mxu0 0.0
        %855 = vmatpush.msra.mxu0 0.0
        %v856 = vand.u32 %v488, 4294901760
        %v857 = vsub.f32 %v488, %v856
        %858 = vmatpush.msra.mxu0 %v857
        %v859 = vand.u32 %v486, 4294901760
        %v860 = vsub.f32 %v486, %v859
        %861 = vmatpush.msra.mxu0 %v860
        %v862 = vand.u32 %v484, 4294901760
        %v863 = vsub.f32 %v484, %v862
        %864 = vmatpush.msra.mxu0 %v863
        %v865 = vand.u32 %v482, 4294901760
        %v866 = vsub.f32 %v482, %v865
        %867 = vmatpush.msra.mxu0 %v866
        %v868 = vand.u32 %v480, 4294901760
        %v869 = vsub.f32 %v480, %v868
        %870 = vmatpush.msra.mxu0 %v869
        %v871 = vand.u32 %v478, 4294901760
        %v872 = vsub.f32 %v478, %v871
        %873 = vmatpush.msra.mxu0 %v872
        %v874 = vand.u32 %v476, 4294901760
        %v875 = vsub.f32 %v476, %v874
        %876 = vmatpush.msra.mxu0 %v875
        %v877 = vand.u32 %v474, 4294901760
        %v878 = vsub.f32 %v474, %v877
        %879 = vmatpush.msra.mxu0 %v878
        %v880 = vand.u32 %v472, 4294901760
        %v881 = vsub.f32 %v472, %v880
        %882 = vmatpush.msra.mxu0 %v881
        %v883 = vand.u32 %v497, 4294901760
        %v884 = vsub.f32 %v497, %v883
        %885 = vmatmul.f32.gmra.mxu0 %v884
        %v886 = vpop.f32.mrf.mxu0
        %v887 = vadd.f32 %v847, %v886
        %888 = vdwg.mxu0
        %889 = vmatpush.msra.mxu0 0.0
        %890 = vmatpush.msra.mxu0 0.0
        %891 = vmatpush.msra.mxu0 0.0
        %892 = vmatpush.msra.mxu0 0.0
        %893 = vmatpush.msra.mxu0 0.0
        %894 = vmatpush.msra.mxu0 0.0
        %895 = vmatpush.msra.mxu0 0.0
        %v896 = vand.u32 %v488, 4294901760
        %897 = vmatpush.msra.mxu0 %v896
        %v898 = vand.u32 %v486, 4294901760
        %899 = vmatpush.msra.mxu0 %v898
        %v900 = vand.u32 %v484, 4294901760
        %901 = vmatpush.msra.mxu0 %v900
        %v902 = vand.u32 %v482, 4294901760
        %903 = vmatpush.msra.mxu0 %v902
        %v904 = vand.u32 %v480, 4294901760
        %905 = vmatpush.msra.mxu0 %v904
        %v906 = vand.u32 %v478, 4294901760
        %907 = vmatpush.msra.mxu0 %v906
        %v908 = vand.u32 %v476, 4294901760
        %909 = vmatpush.msra.mxu0 %v908
        %v910 = vand.u32 %v474, 4294901760
        %911 = vmatpush.msra.mxu0 %v910
        %v912 = vand.u32 %v472, 4294901760
        %913 = vmatpush.msra.mxu0 %v912
        %v914 = vand.u32 %v497, 4294901760
        %v915 = vsub.f32 %v497, %v914
        %v916 = vand.u32 %v915, 4294901760
        %917 = vmatmul.f32.gmra.mxu0 %v916
        %v918 = vpop.f32.mrf.mxu0
        %v919 = vadd.f32 %v887, %v918
        %920 = vdwg.mxu0
        %921 = vmatpush.msra.mxu0 0.0
        %922 = vmatpush.msra.mxu0 0.0
        %923 = vmatpush.msra.mxu0 0.0
        %924 = vmatpush.msra.mxu0 0.0
        %925 = vmatpush.msra.mxu0 0.0
        %926 = vmatpush.msra.mxu0 0.0
        %927 = vmatpush.msra.mxu0 0.0
        %v928 = vand.u32 %v488, 4294901760
        %v929 = vsub.f32 %v488, %v928
        %v930 = vand.u32 %v929, 4294901760
        %931 = vmatpush.msra.mxu0 %v930
        %v932 = vand.u32 %v486, 4294901760
        %v933 = vsub.f32 %v486, %v932
        %v934 = vand.u32 %v933, 4294901760
        %935 = vmatpush.msra.mxu0 %v934
        %v936 = vand.u32 %v484, 4294901760
        %v937 = vsub.f32 %v484, %v936
        %v938 = vand.u32 %v937, 4294901760
        %939 = vmatpush.msra.mxu0 %v938
        %v940 = vand.u32 %v482, 4294901760
        %v941 = vsub.f32 %v482, %v940
        %v942 = vand.u32 %v941, 4294901760
        %943 = vmatpush.msra.mxu0 %v942
        %v944 = vand.u32 %v480, 4294901760
        %v945 = vsub.f32 %v480, %v944
        %v946 = vand.u32 %v945, 4294901760
        %947 = vmatpush.msra.mxu0 %v946
        %v948 = vand.u32 %v478, 4294901760
        %v949 = vsub.f32 %v478, %v948
        %v950 = vand.u32 %v949, 4294901760
        %951 = vmatpush.msra.mxu0 %v950
        %v952 = vand.u32 %v476, 4294901760
        %v953 = vsub.f32 %v476, %v952
        %v954 = vand.u32 %v953, 4294901760
        %955 = vmatpush.msra.mxu0 %v954
        %v956 = vand.u32 %v474, 4294901760
        %v957 = vsub.f32 %v474, %v956
        %v958 = vand.u32 %v957, 4294901760
        %959 = vmatpush.msra.mxu0 %v958
        %v960 = vand.u32 %v472, 4294901760
        %v961 = vsub.f32 %v472, %v960
        %v962 = vand.u32 %v961, 4294901760
        %963 = vmatpush.msra.mxu0 %v962
        %v964 = vand.u32 %v497, 4294901760
        %965 = vmatmul.f32.gmra.mxu0 %v964
        %v966 = vpop.f32.mrf.mxu0
        %v967 = vadd.f32 %v919, %v966
        %968 = vdwg.mxu0
        %969 = vmatpush.msra.mxu0 0.0
        %970 = vmatpush.msra.mxu0 0.0
        %971 = vmatpush.msra.mxu0 0.0
        %972 = vmatpush.msra.mxu0 0.0
        %973 = vmatpush.msra.mxu0 0.0
        %974 = vmatpush.msra.mxu0 0.0
        %975 = vmatpush.msra.mxu0 0.0
        %v976 = vand.u32 %v488, 4294901760
        %977 = vmatpush.msra.mxu0 %v976
        %v978 = vand.u32 %v486, 4294901760
        %979 = vmatpush.msra.mxu0 %v978
        %v980 = vand.u32 %v484, 4294901760
        %981 = vmatpush.msra.mxu0 %v980
        %v982 = vand.u32 %v482, 4294901760
        %983 = vmatpush.msra.mxu0 %v982
        %v984 = vand.u32 %v480, 4294901760
        %985 = vmatpush.msra.mxu0 %v984
        %v986 = vand.u32 %v478, 4294901760
        %987 = vmatpush.msra.mxu0 %v986
        %v988 = vand.u32 %v476, 4294901760
        %989 = vmatpush.msra.mxu0 %v988
        %v990 = vand.u32 %v474, 4294901760
        %991 = vmatpush.msra.mxu0 %v990
        %v992 = vand.u32 %v472, 4294901760
        %993 = vmatpush.msra.mxu0 %v992
        %v994 = vand.u32 %v497, 4294901760
        %995 = vmatmul.f32.gmra.mxu0 %v994
        %v996 = vpop.f32.mrf.mxu0
        %v997 = vadd.f32 %v967, %v996
        %998 = vdwg.mxu0
        %999 = vst [vmem:[%s289] sm:$0xff] %v747
        %1000 = vst [vmem:[%s289 + $0x8] sm:$0xff] %v997
        %s1001 = sand.u32 %s148, 1
        %s1002 = scalar_lea.sflag [#allocation5], %s1001
        %s1003 = sand.u32 %s148, 1
        %s1004 = smul.addr %s1003, 16
        %s1005 = scalar_lea.vmem [#allocation8], %s1004
        // Predicated region
        $region45: #{tpu_custom_call.1} parent=35 // pred_check
          %p1006 = pneg %p158
        $region46: #{tpu_custom_call.1} parent=35 // pred_check_branch
          %1008 = sbr.rel (%p1006) target = $region48
        $region47: #{tpu_custom_call.1} parent=35 // pred_region
          %s1009 = smul.u32 2, %s29
          %1011 = vsyncadd %s1002, 0
          %s1012 = smul.addr %s28, 2
          %s1013 = sadd.s32 %s1009, %s1012
          %s1014 = smul.addr %s1013, 8
          %s1015 = scalar_lea.hbm %s4, %s1014
          %s1017 = sshll.u32 %s1005, 4
          %s1018 = int_to_ptr.vmem [resolvable:$true] %s1017
          %s1019 = sshll.u32 %s1015, 4
          %s1020 = int_to_ptr.hbm [resolvable:$true] %s1019
          %1022 = dma.vmem_to_hbm [thread:$0]  %s1018, 256, %s1020, %s1002
        $region48: #{tpu_custom_call.1} parent=35 // pred_fallthru
          _
      $region36: #{tpu_custom_call.1} parent=5 // pred_fallthru
        _
      %p1023 = scmp.le.s32.totalorder 2, %s19
      // Predicated region
      $region49: #{tpu_custom_call.1} parent=5 // pred_check
        %p1024 = pneg %p1023
      $region50: #{tpu_custom_call.1} parent=5 // pred_check_branch
        %1026 = sbr.rel (%p1024) target = $region52
      $region51: #{tpu_custom_call.1} parent=5 // pred_region
        %s1027 = ssub.s32 %s19, 2
        // Predicated region
        $region53: #{tpu_custom_call.1} parent=51 // pred_check
          %p1028 = pneg %p164
        $region54: #{tpu_custom_call.1} parent=51 // pred_check_branch
          %1030 = sbr.rel (%p1028) target = $region56
        $region55: #{tpu_custom_call.1} parent=51 // pred_region
          %s1031 = sand.u32 %s149, 1
          %s1032 = scalar_lea.sflag [#allocation5], %s1031
          %s1033 = sand.u32 %s149, 1
          %s1034 = smul.addr %s1033, 16
          %s1035 = scalar_lea.vmem [#allocation8], %s1034
          %1037 = dma.done %s1032, 256
        $region56: #{tpu_custom_call.1} parent=51 // pred_fallthru
          _
      $region52: #{tpu_custom_call.1} parent=5 // pred_fallthru
        _
    $region6: #{tpu_custom_call.1} parent=1 // loop_footer
      %s23 = sadd.s32 1, %s19
    $region7: #{tpu_custom_call.1} parent=1 // loop_footer_branch
      %18 = sbr.rel target = $region3
    $region8: #{tpu_custom_call.1} parent=1 // loop_exit
      _
    %1038 = vsyncpa [#allocation4], 1
    %s1039 = scalar_lea.sflag [#allocation4], 1
    %1040 = vsyncpa %s1039, 1
    %1041 = vsyncpa [#allocation7], 1
    %s1042 = scalar_lea.sflag [#allocation7], 1
    %1043 = vsyncpa %s1042, 1
    %1044 = vsyncpa [#allocation5], 1
    %s1045 = scalar_lea.sflag [#allocation5], 1
    %1046 = vsyncpa %s1045, 1

</llo_original>
